<compile_context>
chip_gen: v7x
topology: tpu7x:2x2x1
jax: 0.10.0
libtpu: 0.0.40
codegen_flags: <defaults>
</compile_context>

<pallas_src>
import math
from functools import partial

import jax
import jax.numpy as jnp
from jax.experimental import pallas as pl
from jax.experimental.pallas import tpu as pltpu


# --------------------------------------------------------------------------- #
# Kernel
# --------------------------------------------------------------------------- #
def _mol_adapter_kernel(residual, Bt, S, C,
                        x_ref,      # (Bt*S, H)  f32   token features (cast to bf16 in-kernel)
                        nb_ref,     # (Bt*S, 1)  f32   additive token mask (0 / -1e9)
                        qpt_ref,    # (Bt*C, H)  f32   W_Q(Q), pre-tiled over Bt
                        gt_ref,     # (H, C)     bf16  ((W_Q(Q)/sqrt(H)) @ W_K)^T
                        d_ref,      # (1, C)     f32   (W_Q(Q)/sqrt(H)) @ b_K
                        wv_ref,     # (H, H)     bf16  W_V^T
                        bv_ref,     # (1, H)     f32   b_V
                        wo_ref,     # (H, H)     bf16  W_O^T
                        bo_ref,     # (1, H)     f32   b_O
                        out_ref,    # (Bt, C, H) f32   adapter output block
                        idx_ref,    # (Bt*S, 1)  i32   cluster assignment
                        ax_sc,      # (Bt*C, H)  f32   scratch: stacked A_b @ x_b
                        rs_sc):     # (Bt*C, 1)  f32   scratch: stacked rowsum(A_b)
    # x streamed as f32 from HBM; single bf16 cast for all MXU uses (hoisted).
    xb = x_ref[...].astype(jnp.bfloat16)                                # (Bt*S, H)

    # scores[t, c] = x_t . g_c + d_c + mask_t   (W_K / b_K / 1/sqrt(H) folded at prep)
    s = jnp.dot(xb, gt_ref[...], preferred_element_type=jnp.float32)   # (Bt*S, C)
    s = s + d_ref[...] + nb_ref[...]

    # softmax over the cluster axis (last), numerically stable; divide on the EUP.
    cmax = jnp.max(s, axis=-1, keepdims=True)                          # (Bt*S, 1)
    e = jnp.exp(s - cmax)
    a = e * pl.reciprocal(jnp.sum(e, axis=-1, keepdims=True), approx=True)

    # cluster assignment = first-index argmax over clusters (softmax is monotone
    # per token, so argmax(scores) == argmax(softmax); cmax reused).
    iota_c = jax.lax.broadcasted_iota(jnp.int32, s.shape, 1)
    idx_ref[...] = jnp.min(jnp.where(s == cmax, iota_c, jnp.int32(C)),
                           axis=-1, keepdims=True)                     # (Bt*S, 1)

    # ---- per-batch A_b @ x_b and rowsum(A_b), stacked into (Bt*C, .) scratch ----
    a_bf = a.astype(jnp.bfloat16)                 # single hoisted cast of A
    ones_col = jnp.ones((S, 1), jnp.bfloat16)
    dn = (((0,), (0,)), ((), ()))                 # contract over the token axis
    for b in range(Bt):                           # static; Bt kept small by wrapper
        a_b = a_bf[b * S:(b + 1) * S, :]          # (S, C)
        x_b = xb[b * S:(b + 1) * S, :]            # (S, H)
        ax_sc[b * C:(b + 1) * C, :] = jax.lax.dot_general(
            a_b, x_b, dn, preferred_element_type=jnp.float32)          # A_b @ x_b
        rs_sc[b * C:(b + 1) * C, :] = jax.lax.dot_general(
            a_b, ones_col, dn, preferred_element_type=jnp.float32)     # rowsum(A_b)

    # ---- stacked epilogue: two (Bt*C, H) @ (H, H) MXU matmuls -------------------
    # base = Qp + (A @ x) @ W_V^T + rowsum(A) * b_V   (== Qp + A @ (W_V x + b_V))
    base = (qpt_ref[...]
            + jnp.dot(ax_sc[...].astype(jnp.bfloat16), wv_ref[...],
                      preferred_element_type=jnp.float32)
            + rs_sc[...] * bv_ref[...])                                # (Bt*C, H)
    o = jnp.dot(base.astype(jnp.bfloat16), wo_ref[...],
                preferred_element_type=jnp.float32) + bo_ref[...]
    o = jnp.maximum(o, 0.0)
    if residual:
        o = base + o
    for b in range(Bt):                           # static slices of the stacked result
        out_ref[b] = o[b * C:(b + 1) * C, :]


# --------------------------------------------------------------------------- #
# Parameter init / prep
# --------------------------------------------------------------------------- #
def init_params(key, hidden_dim, num_clusters):
    """Deterministic synthetic init (shapes/init match the PyTorch module)."""
    ks = jax.random.split(key, 9)
    bound_q = math.sqrt(6.0 / (num_clusters * hidden_dim + hidden_dim))  # xavier_uniform_
    Q = jax.random.uniform(ks[0], (1, num_clusters, hidden_dim),
                           jnp.float32, -bound_q, bound_q)

    def linear(kw, kb):
        lim = 1.0 / math.sqrt(hidden_dim)
        w = jax.random.uniform(kw, (hidden_dim, hidden_dim), jnp.float32, -lim, lim)  # (out, in)
        b = jax.random.uniform(kb, (hidden_dim,), jnp.float32, -lim, lim)
        return w, b

    wq, bq = linear(ks[1], ks[2])
    wk, bk = linear(ks[3], ks[4])
    wv, bv = linear(ks[5], ks[6])
    wo, bo = linear(ks[7], ks[8])
    return dict(Q=Q, W_Q_w=wq, W_Q_b=bq, W_K_w=wk, W_K_b=bk,
                W_V_w=wv, W_V_b=bv, W_O_w=wo, W_O_b=bo)


def prepare_params(params):
    """One-time weight prep: W_Q hoisting, W_K / 1/sqrt(H) fusion, transposes, bf16 casts."""
    Q = params["Q"]
    C, H = Q.shape[1], Q.shape[2]
    q = Q.reshape(C, H).astype(jnp.float32)

    qp = q @ params["W_Q_w"].T + params["W_Q_b"][None, :]               # (C, H) = W_Q(Q)
    qps = qp * (1.0 / math.sqrt(H))
    g = qps @ params["W_K_w"]                                           # (C, H)
    d = (qps @ params["W_K_b"]).reshape(1, C)                           # (1, C)

    return dict(
        qp=qp.astype(jnp.float32),
        gt=g.T.astype(jnp.bfloat16),                                    # (H, C)
        d=d.astype(jnp.float32),
        wv=params["W_V_w"].T.astype(jnp.bfloat16),                      # (H, H)
        bv=params["W_V_b"].reshape(1, H).astype(jnp.float32),
        wo=params["W_O_w"].T.astype(jnp.bfloat16),                      # (H, H)
        bo=params["W_O_b"].reshape(1, H).astype(jnp.float32),
    )


# --------------------------------------------------------------------------- #
# Wrapper
# --------------------------------------------------------------------------- #
def _pick_block_batches(B, S, target_rows=512, max_unroll=32):
    """Largest legal batch fold Bt: Bt | B, Bt*S sublane-aligned (or Bt == B),
    at least 2 grid steps when B >= 2 (v7x has 2 TensorCores), ~512 token rows
    per step (safe under v5e's 16 MiB default scoped VMEM), bounded static unroll."""
    cands = [bt for bt in range(1, B + 1)
             if B % bt == 0 and ((bt * S) % 8 == 0 or bt == B)]
    multi = [bt for bt in cands if bt <= B // 2] or cands
    fit = [bt for bt in multi if bt * S <= target_rows and bt <= max_unroll]
    return max(fit) if fit else min(multi)


def _vmem_bytes_estimate(Bt, S, H, C, x_itemsize):
    def tile(r, c, itemsize):
        rp = (max(r, 1) + 7) // 8 * 8
        cp = (max(c, 1) + 127) // 128 * 128
        return rp * cp * itemsize
    stream = 2 * (tile(Bt * S, H, x_itemsize) + 2 * tile(Bt * S, 1, 4)
                  + Bt * tile(C, H, 4))
    consts = 2 * (tile(Bt * C, H, 4) + tile(H, C, 2) + tile(1, C, 4)
                  + 2 * tile(H, H, 2) + 2 * tile(1, H, 4))
    scratch = tile(Bt * C, H, 4) + tile(Bt * C, 1, 4)
    return stream + consts + scratch


def mol_adapter_forward(x, mask, prep, residual=False, block_batches=None):
    B, S, H = x.shape
    C = prep["qp"].shape[0]

    Bt = block_batches if block_batches is not None else _pick_block_batches(B, S)
    assert B % Bt == 0
    grid = (B // Bt,)

    # x streamed in its native dtype (bf16 cast happens in-kernel); mask as an
    # additive (B*S, 1) column; Qp pre-tiled over the batch fold.
    x2 = x.reshape(B * S, H)
    nb = jnp.where(mask.reshape(B * S, 1), 0.0, -1e9).astype(jnp.float32)
    qpt = jnp.tile(prep["qp"], (Bt, 1))                                  # (Bt*C, H)

    def const_spec(shape):
        idx_map = lambda i, _n=len(shape): (0,) * _n
        try:
            # Batch-invariant operand: single-buffer it (halves its VMEM footprint).
            return pl.BlockSpec(shape, idx_map, pipeline_mode=pl.Buffered(1))
        except (TypeError, AttributeError):
            return pl.BlockSpec(shape, idx_map)

    const_bytes = sum(int(a.size) * a.dtype.itemsize
                      for a in (qpt, prep["gt"], prep["d"], prep["wv"],
                                prep["bv"], prep["wo"], prep["bo"]))
    cost = pl.CostEstimate(
        flops=2 * B * S * H * C + 2 * B * C * S * H + 2 * B * C * S + 4 * B * C * H * H,
        transcendentals=B * S * C,
        bytes_accessed=int(x2.size) * x2.dtype.itemsize + int(nb.size) * 4
                       + B * C * H * 4 + B * S * 4 + const_bytes,
    )
    vmem_limit = int(min(100 * 2**20,
                         max(32 * 2**20,
                             2 * _vmem_bytes_estimate(Bt, S, H, C, x2.dtype.itemsize))))

    out, idx = pl.pallas_call(
        partial(_mol_adapter_kernel, residual, Bt, S, C),
        out_shape=(jax.ShapeDtypeStruct((B, C, H), jnp.float32),
                   jax.ShapeDtypeStruct((B * S, 1), jnp.int32)),
        grid_spec=pltpu.PrefetchScalarGridSpec(
            num_scalar_prefetch=0,
            grid=grid,
            in_specs=[
                pl.BlockSpec((Bt * S, H), lambda i: (i, 0)),     # x tokens
                pl.BlockSpec((Bt * S, 1), lambda i: (i, 0)),     # additive mask column
                const_spec((Bt * C, H)),                         # Qp (tiled)
                const_spec((H, C)),                              # fused score weight^T
                const_spec((1, C)),                              # fused score bias
                const_spec((H, H)),                              # W_V^T
                const_spec((1, H)),                              # b_V
                const_spec((H, H)),                              # W_O^T
                const_spec((1, H)),                              # b_O
            ],
            out_specs=(
                pl.BlockSpec((Bt, C, H), lambda i: (i, 0, 0)),   # adapter output
                pl.BlockSpec((Bt * S, 1), lambda i: (i, 0)),     # cluster assignment
            ),
            scratch_shapes=[pltpu.VMEM((Bt * C, H), jnp.float32),
                            pltpu.VMEM((Bt * C, 1), jnp.float32)],
        ),
        # "parallel" lets v7x shard the batch-block axis across its 2 TensorCores
        # (the chooser keeps >= 2 grid steps whenever B >= 2).
        compiler_params=pltpu.CompilerParams(dimension_semantics=("parallel",),
                                             vmem_limit_bytes=vmem_limit),
        cost_estimate=cost,
    )(x2, nb, qpt, prep["gt"], prep["d"],
      prep["wv"], prep["bv"], prep["wo"], prep["bo"])

    return out, idx.reshape(B, S), mask


# --------------------------------------------------------------------------- #
# Plain-JAX reference (mirrors the PyTorch module in f32)
# --------------------------------------------------------------------------- #
def mol_adapter_reference(x, mask, params, residual=False):
    B, S, H = x.shape
    Q = params["Q"]
    K = x @ params["W_K_w"].T + params["W_K_b"]
    V = x @ params["W_V_w"].T + params["W_V_b"]
    Qp = jnp.tile(Q, (B, 1, 1)) @ params["W_Q_w"].T + params["W_Q_b"]
    A = Qp @ jnp.swapaxes(K, -1, -2) / math.sqrt(H)
    A = A + jnp.where(mask, 0.0, -1e9)[:, None, :]
    A = jax.nn.softmax(A, axis=-2)
    out = Qp + A @ V
    proj = jax.nn.relu(out @ params["W_O_w"].T + params["W_O_b"])
    out = out + proj if residual else proj
    assign = jnp.argmax(A, axis=-2)
    return out, assign, mask


if __name__ == "__main__":
    B, S, H, C = 2, 8, 32, 4     # batch, seq, hidden_dim, num_clusters

    key = jax.random.PRNGKey(0)
    k_x, k_p = jax.random.split(key, 2)

    x = jax.random.normal(k_x, (B, S, H), jnp.float32)
    lengths = jnp.array([S, 5], dtype=jnp.int32)
    mask = jnp.arange(S)[None, :] < lengths[:, None]          # (B, S) bool, True = valid

    params = init_params(k_p, H, C)
    prep = prepare_params(params)

    out, assign, mask_out = mol_adapter_forward(x, mask, prep, residual=False)
    jax.block_until_ready((out, assign))

    assert out.shape == (B, C, H) and out.dtype == jnp.float32
    assert assign.shape == (B, S) and assign.dtype == jnp.int32
    assert bool(jnp.all((assign >= 0) & (assign < C)))
    assert mask_out.shape == (B, S)

    # Loose sanity check against a plain-JAX f32 reference (kernel uses bf16 MXU
    # inputs with f32 accumulation + approx reciprocal, so exact match not expected).
    ref_out, _, _ = mol_adapter_reference(x, mask, params, residual=False)
    assert bool(jnp.allclose(out, ref_out, atol=1e-1, rtol=1e-1)), \
        float(jnp.max(jnp.abs(out - ref_out)))

    print("KERNEL_OK")
</pallas_src>

<mosaic_0001>
module attributes {stable_mosaic.version = 11 : i64} {
  func.func @_mol_adapter_kernel(%arg0: i32, %arg1: memref<8x32xf32, #tpu.memory_space<vmem>>, %arg2: memref<8x1xf32, #tpu.memory_space<vmem>>, %arg3: memref<4x32xf32, #tpu.memory_space<vmem>>, %arg4: memref<32x4xbf16, #tpu.memory_space<vmem>>, %arg5: memref<1x4xf32, #tpu.memory_space<vmem>>, %arg6: memref<32x32xbf16, #tpu.memory_space<vmem>>, %arg7: memref<1x32xf32, #tpu.memory_space<vmem>>, %arg8: memref<32x32xbf16, #tpu.memory_space<vmem>>, %arg9: memref<1x32xf32, #tpu.memory_space<vmem>>, %arg10: memref<1x4x32xf32, #tpu.memory_space<vmem>>, %arg11: memref<8x1xi32, #tpu.memory_space<vmem>>, %arg12: memref<4x32xf32, #tpu.memory_space<vmem>>, %arg13: memref<4x1xf32, #tpu.memory_space<vmem>>) attributes {dimension_semantics = [#tpu.dimension_semantics<parallel>], iteration_bounds = array<i64: 2>, scalar_prefetch = 0 : i64, scratch_operands = 2 : i64, tpu.core_type = #tpu.core_type<tc>, window_params = [{transform_indices = @transform_0, window_bounds = array<i64: 8, 32>}, {transform_indices = @transform_1, window_bounds = array<i64: 8, 1>}, {pipeline_mode = #tpu.pipeline_mode<synchronous>, transform_indices = @transform_2, window_bounds = array<i64: 4, 32>}, {pipeline_mode = #tpu.pipeline_mode<synchronous>, transform_indices = @transform_3, window_bounds = array<i64: 32, 4>}, {pipeline_mode = #tpu.pipeline_mode<synchronous>, transform_indices = @transform_4, window_bounds = array<i64: 1, 4>}, {pipeline_mode = #tpu.pipeline_mode<synchronous>, transform_indices = @transform_5, window_bounds = array<i64: 32, 32>}, {pipeline_mode = #tpu.pipeline_mode<synchronous>, transform_indices = @transform_6, window_bounds = array<i64: 1, 32>}, {pipeline_mode = #tpu.pipeline_mode<synchronous>, transform_indices = @transform_7, window_bounds = array<i64: 32, 32>}, {pipeline_mode = #tpu.pipeline_mode<synchronous>, transform_indices = @transform_8, window_bounds = array<i64: 1, 32>}, {transform_indices = @transform_9, window_bounds = array<i64: 1, 4, 32>}, {transform_indices = @transform_10, window_bounds = array<i64: 8, 1>}]} {
    %c0 = arith.constant 0 : index
    %c0_0 = arith.constant 0 : index
    %0 = vector.load %arg1[%c0, %c0_0] : memref<8x32xf32, #tpu.memory_space<vmem>>, vector<8x32xf32>
    %1 = arith.truncf %0 : vector<8x32xf32> to vector<8x32xbf16>
    %c0_1 = arith.constant 0 : index
    %c0_2 = arith.constant 0 : index
    %2 = vector.load %arg4[%c0_1, %c0_2] : memref<32x4xbf16, #tpu.memory_space<vmem>>, vector<32x4xbf16>
    %cst = arith.constant dense<0.000000e+00> : vector<8x4xf32>
    %3 = tpu.matmul %1, %2, %cst {dimension_numbers = #tpu.dot_dimension_numbers<[1], [0], [0], [1], [0, 0, 1, 1], [], []>} : vector<8x32xbf16>, vector<32x4xbf16>, vector<8x4xf32> -> vector<8x4xf32>
    %c0_3 = arith.constant 0 : index
    %c0_4 = arith.constant 0 : index
    %4 = vector.load %arg5[%c0_3, %c0_4] : memref<1x4xf32, #tpu.memory_space<vmem>>, vector<1x4xf32>
    %5 = vector.broadcast %4 : vector<1x4xf32> to vector<8x4xf32>
    %6 = arith.addf %3, %5 : vector<8x4xf32>
    %c0_5 = arith.constant 0 : index
    %c0_6 = arith.constant 0 : index
    %7 = vector.load %arg2[%c0_5, %c0_6] : memref<8x1xf32, #tpu.memory_space<vmem>>, vector<8x1xf32>
    %8 = vector.broadcast %7 : vector<8x1xf32> to vector<8x4xf32>
    %9 = arith.addf %6, %8 : vector<8x4xf32>
    %cst_7 = arith.constant dense<0xFF800000> : vector<8xf32>
    %10 = vector.multi_reduction <maximumf>, %9, %cst_7 [1] : vector<8x4xf32> to vector<8xf32>
    %11 = vector.shape_cast %10 : vector<8xf32> to vector<8x1xf32>
    %12 = vector.broadcast %11 : vector<8x1xf32> to vector<8x4xf32>
    %13 = arith.subf %9, %12 : vector<8x4xf32>
    %14 = math.exp %13 : vector<8x4xf32>
    %cst_8 = arith.constant dense<0.000000e+00> : vector<8xf32>
    %15 = vector.multi_reduction <add>, %14, %cst_8 [1] : vector<8x4xf32> to vector<8xf32>
    %16 = vector.shape_cast %15 : vector<8xf32> to vector<8x1xf32>
    %17 = tpu.reciprocal %16 {approx = true} : vector<8x1xf32> -> vector<8x1xf32>
    %18 = vector.broadcast %17 : vector<8x1xf32> to vector<8x4xf32>
    %19 = arith.mulf %14, %18 : vector<8x4xf32>
    %20 = tpu.iota {dimensions = array<i32: 1>} : vector<8x4xi32>
    %21 = vector.broadcast %11 : vector<8x1xf32> to vector<8x4xf32>
    %22 = arith.cmpf oeq, %9, %21 : vector<8x4xf32>
    %c4_i32 = arith.constant 4 : i32
    %23 = vector.broadcast %c4_i32 : i32 to vector<8x4xi32>
    %24 = arith.select %22, %20, %23 : vector<8x4xi1>, vector<8x4xi32>
    %cst_9 = arith.constant dense<2147483647> : vector<8xi32>
    %25 = vector.multi_reduction <minsi>, %24, %cst_9 [1] : vector<8x4xi32> to vector<8xi32>
    %26 = vector.shape_cast %25 : vector<8xi32> to vector<8x1xi32>
    %c0_10 = arith.constant 0 : index
    %c0_11 = arith.constant 0 : index
    %27 = vector.load %arg11[%c0_10, %c0_11] : memref<8x1xi32, #tpu.memory_space<vmem>>, vector<8x1xi32>
    tpu.vector_store %arg11[%c0_10, %c0_11], %26 {strides = array<i32>} : memref<8x1xi32, #tpu.memory_space<vmem>>, vector<8x1xi32>,
    %28 = arith.truncf %19 : vector<8x4xf32> to vector<8x4xbf16>
    %cst_12 = arith.constant 1.000000e+00 : bf16
    %29 = vector.broadcast %cst_12 : bf16 to vector<8x1xbf16>
    %cst_13 = arith.constant dense<0.000000e+00> : vector<4x32xf32>
    %30 = tpu.matmul %28, %1, %cst_13 {dimension_numbers = #tpu.dot_dimension_numbers<[0], [0], [1], [1], [0, 1, 1, 1], [], []>} : vector<8x4xbf16>, vector<8x32xbf16>, vector<4x32xf32> -> vector<4x32xf32>
    %c0_14 = arith.constant 0 : index
    %c0_15 = arith.constant 0 : index
    %31 = vector.load %arg12[%c0_14, %c0_15] : memref<4x32xf32, #tpu.memory_space<vmem>>, vector<4x32xf32>
    tpu.vector_store %arg12[%c0_14, %c0_15], %30 {strides = array<i32>} : memref<4x32xf32, #tpu.memory_space<vmem>>, vector<4x32xf32>,
    %cst_16 = arith.constant dense<0.000000e+00> : vector<4x1xf32>
    %32 = tpu.matmul %28, %29, %cst_16 {dimension_numbers = #tpu.dot_dimension_numbers<[0], [0], [1], [1], [0, 1, 1, 1], [], []>} : vector<8x4xbf16>, vector<8x1xbf16>, vector<4x1xf32> -> vector<4x1xf32>
    %c0_17 = arith.constant 0 : index
    %c0_18 = arith.constant 0 : index
    %33 = vector.load %arg13[%c0_17, %c0_18] : memref<4x1xf32, #tpu.memory_space<vmem>>, vector<4x1xf32>
    tpu.vector_store %arg13[%c0_17, %c0_18], %32 {strides = array<i32>} : memref<4x1xf32, #tpu.memory_space<vmem>>, vector<4x1xf32>,
    %c0_19 = arith.constant 0 : index
    %c0_20 = arith.constant 0 : index
    %34 = vector.load %arg3[%c0_19, %c0_20] : memref<4x32xf32, #tpu.memory_space<vmem>>, vector<4x32xf32>
    %c0_21 = arith.constant 0 : index
    %c0_22 = arith.constant 0 : index
    %35 = vector.load %arg12[%c0_21, %c0_22] : memref<4x32xf32, #tpu.memory_space<vmem>>, vector<4x32xf32>
    %36 = arith.truncf %35 : vector<4x32xf32> to vector<4x32xbf16>
    %c0_23 = arith.constant 0 : index
    %c0_24 = arith.constant 0 : index
    %37 = vector.load %arg6[%c0_23, %c0_24] : memref<32x32xbf16, #tpu.memory_space<vmem>>, vector<32x32xbf16>
    %cst_25 = arith.constant dense<0.000000e+00> : vector<4x32xf32>
    %38 = tpu.matmul %36, %37, %cst_25 {dimension_numbers = #tpu.dot_dimension_numbers<[1], [0], [0], [1], [0, 0, 1, 1], [], []>} : vector<4x32xbf16>, vector<32x32xbf16>, vector<4x32xf32> -> vector<4x32xf32>
    %39 = arith.addf %34, %38 : vector<4x32xf32>
    %c0_26 = arith.constant 0 : index
    %c0_27 = arith.constant 0 : index
    %40 = vector.load %arg13[%c0_26, %c0_27] : memref<4x1xf32, #tpu.memory_space<vmem>>, vector<4x1xf32>
    %c0_28 = arith.constant 0 : index
    %c0_29 = arith.constant 0 : index
    %41 = vector.load %arg7[%c0_28, %c0_29] : memref<1x32xf32, #tpu.memory_space<vmem>>, vector<1x32xf32>
    %42 = vector.broadcast %40 : vector<4x1xf32> to vector<4x32xf32>
    %43 = vector.broadcast %41 : vector<1x32xf32> to vector<4x32xf32>
    %44 = arith.mulf %42, %43 : vector<4x32xf32>
    %45 = arith.addf %39, %44 : vector<4x32xf32>
    %46 = arith.truncf %45 : vector<4x32xf32> to vector<4x32xbf16>
    %c0_30 = arith.constant 0 : index
    %c0_31 = arith.constant 0 : index
    %47 = vector.load %arg8[%c0_30, %c0_31] : memref<32x32xbf16, #tpu.memory_space<vmem>>, vector<32x32xbf16>
    %cst_32 = arith.constant dense<0.000000e+00> : vector<4x32xf32>
    %48 = tpu.matmul %46, %47, %cst_32 {dimension_numbers = #tpu.dot_dimension_numbers<[1], [0], [0], [1], [0, 0, 1, 1], [], []>} : vector<4x32xbf16>, vector<32x32xbf16>, vector<4x32xf32> -> vector<4x32xf32>
    %c0_33 = arith.constant 0 : index
    %c0_34 = arith.constant 0 : index
    %49 = vector.load %arg9[%c0_33, %c0_34] : memref<1x32xf32, #tpu.memory_space<vmem>>, vector<1x32xf32>
    %50 = vector.broadcast %49 : vector<1x32xf32> to vector<4x32xf32>
    %51 = arith.addf %48, %50 : vector<4x32xf32>
    %cst_35 = arith.constant 0.000000e+00 : f32
    %52 = vector.broadcast %cst_35 : f32 to vector<4x32xf32>
    %53 = arith.maximumf %51, %52 : vector<4x32xf32>
    %c0_36 = arith.constant 0 : index
    %c0_37 = arith.constant 0 : index
    %c0_38 = arith.constant 0 : index
    %54 = vector.load %arg10[%c0_36, %c0_37, %c0_38] : memref<1x4x32xf32, #tpu.memory_space<vmem>>, vector<1x4x32xf32>
    %55 = vector.shape_cast %54 : vector<1x4x32xf32> to vector<4x32xf32>
    %56 = vector.shape_cast %53 : vector<4x32xf32> to vector<1x4x32xf32>
    tpu.vector_store %arg10[%c0_36, %c0_37, %c0_38], %56 {strides = array<i32>} : memref<1x4x32xf32, #tpu.memory_space<vmem>>, vector<1x4x32xf32>,
    return
  }
  func.func @transform_0(%arg0: i32) -> (i32, i32) {
    %c0_i32 = arith.constant 0 : i32
    %c0_i32_0 = arith.constant 0 : i32
    return %arg0, %c0_i32 : i32, i32
  }
  func.func @transform_1(%arg0: i32) -> (i32, i32) {
    %c0_i32 = arith.constant 0 : i32
    %c0_i32_0 = arith.constant 0 : i32
    return %arg0, %c0_i32 : i32, i32
  }
  func.func @transform_2(%arg0: i32) -> (i32, i32) {
    %c0_i32 = arith.constant 0 : i32
    %c0_i32_0 = arith.constant 0 : i32
    %c0_i32_1 = arith.constant 0 : i32
    return %c0_i32, %c0_i32_0 : i32, i32
  }
  func.func @transform_3(%arg0: i32) -> (i32, i32) {
    %c0_i32 = arith.constant 0 : i32
    %c0_i32_0 = arith.constant 0 : i32
    %c0_i32_1 = arith.constant 0 : i32
    return %c0_i32, %c0_i32_0 : i32, i32
  }
  func.func @transform_4(%arg0: i32) -> (i32, i32) {
    %c0_i32 = arith.constant 0 : i32
    %c0_i32_0 = arith.constant 0 : i32
    %c0_i32_1 = arith.constant 0 : i32
    return %c0_i32, %c0_i32_0 : i32, i32
  }
  func.func @transform_5(%arg0: i32) -> (i32, i32) {
    %c0_i32 = arith.constant 0 : i32
    %c0_i32_0 = arith.constant 0 : i32
    %c0_i32_1 = arith.constant 0 : i32
    return %c0_i32, %c0_i32_0 : i32, i32
  }
  func.func @transform_6(%arg0: i32) -> (i32, i32) {
    %c0_i32 = arith.constant 0 : i32
    %c0_i32_0 = arith.constant 0 : i32
    %c0_i32_1 = arith.constant 0 : i32
    return %c0_i32, %c0_i32_0 : i32, i32
  }
  func.func @transform_7(%arg0: i32) -> (i32, i32) {
    %c0_i32 = arith.constant 0 : i32
    %c0_i32_0 = arith.constant 0 : i32
    %c0_i32_1 = arith.constant 0 : i32
    return %c0_i32, %c0_i32_0 : i32, i32
  }
  func.func @transform_8(%arg0: i32) -> (i32, i32) {
    %c0_i32 = arith.constant 0 : i32
    %c0_i32_0 = arith.constant 0 : i32
    %c0_i32_1 = arith.constant 0 : i32
    return %c0_i32, %c0_i32_0 : i32, i32
  }
  func.func @transform_9(%arg0: i32) -> (i32, i32, i32) {
    %c0_i32 = arith.constant 0 : i32
    %c0_i32_0 = arith.constant 0 : i32
    %c0_i32_1 = arith.constant 0 : i32
    return %arg0, %c0_i32, %c0_i32_0 : i32, i32, i32
  }
  func.func @transform_10(%arg0: i32) -> (i32, i32) {
    %c0_i32 = arith.constant 0 : i32
    %c0_i32_0 = arith.constant 0 : i32
    return %arg0, %c0_i32 : i32, i32
  }
}

</mosaic_0001>

<llo_original>
// kernel: tpu_custom_call.1
$region0: #{tpu_custom_call.1}
  #allocation0 [shape = 'u32[]', space=smem, size = 0x4, offset = 0x4, fixed_abs, tag = 'smem constant byte address 0x4 - core index']
  #allocation1 [shape = 'u32[144,128]{1,0:T(1,128)}', space=vmem, size = 0x12000, scoped, tag = 'internal scratch']
  #allocation2 [shape = 'f32[4,32]{1,0:T(4,128)}', space=vmem, size = 0x800, scoped, tag = 'scratch operand']
  #allocation3 [shape = 'f32[4,1]{1,0:T(4,128)}', space=vmem, size = 0x800, scoped, tag = 'scratch operand']
  %s0 = inlined_call_operand.vmem [shape: f32[16,32], index: 0, kind: input, shape index: {}]
  %s1 = inlined_call_operand.vmem [shape: f32[16,1], index: 1, kind: input, shape index: {}]
  %s2 = inlined_call_operand.hbm [shape: f32[4,32], index: 2, kind: input, shape index: {}]
  %s3 = inlined_call_operand.vmem [shape: bf16[32,4], index: 3, kind: input, shape index: {}]
  %s4 = inlined_call_operand.hbm [shape: f32[1,4], index: 4, kind: input, shape index: {}]
  %s5 = inlined_call_operand.vmem [shape: bf16[32,32], index: 5, kind: input, shape index: {}]
  %s6 = inlined_call_operand.vmem [shape: f32[1,32], index: 6, kind: input, shape index: {}]
  %s7 = inlined_call_operand.vmem [shape: bf16[32,32], index: 7, kind: input, shape index: {}]
  %s8 = inlined_call_operand.vmem [shape: f32[1,32], index: 8, kind: input, shape index: {}]
  %s9 = inlined_call_operand.hbm [shape: f32[2,4,32], index: 9, kind: output, shape index: {0}]
  %s10 = inlined_call_operand.vmem [shape: s32[16,1], index: 10, kind: output, shape index: {1}]
  %11 = xla_tuple %s9, %s10
  %s12 = sld [smem:[#allocation0]]
  $region85: #{tpu_custom_call.1} parent=0
    _
  %s14 = ssub.s32 1, %s12
  %s15 = scalar_select 0, %s14, %s12
  $region1: #{tpu_custom_call.1} parent=0
    #allocation4 [shape = 'u8[2048]{0}', space=vmem, size = 0x800, scoped, tag = 'input window, operand 2, single buffered']
    #allocation5 [shape = 's32[2]{0}', space=sflag, size = 0x8, scoped, tag = 'scoped memory for tpu_custom_call.1']
    #allocation6 [shape = 's32[2]{0}', space=sflag, size = 0x8, scoped, tag = 'scoped memory for tpu_custom_call.1']
    #allocation7 [shape = 'u8[512]{0}', space=vmem, size = 0x400, scoped, tag = 'input window, operand 4, single buffered']
    #allocation8 [shape = 's32[1]{0}', space=sflag, size = 0x4, scoped, tag = 'scoped memory for tpu_custom_call.1']
    #allocation9 [shape = 'u8[4096]{0}', space=vmem, size = 0x1000, scoped, tag = 'output window, operand 0']
    %16 = vsyncpa [#allocation5], 0
    %17 = vsyncpa [#allocation8], 0
    %18 = vsyncpa [#allocation6], 0
    %s19 = scalar_lea.sflag [#allocation6], 1
    %20 = vsyncpa %s19, 0
    loop: start=0, step=1, limit=4
    $region2: #{tpu_custom_call.1} parent=1 // loop_pre_header
      _
    $region3: #{tpu_custom_call.1} parent=1 // loop_header
      %s22 = sphi 0, %s26
      %p23 = scmp.ge.s32.totalorder %s22, 4
      %s32 = sphi 0, %s34
      %s35 = sphi 0, %s32
      %s36 = sphi 0, %s35
      %s52 = sphi 0, %s36
      %s58 = sphi 0, %s60
      %s61 = sphi 0, %s58
      %s62 = sphi 0, %s61
      %s78 = sphi 0, %s62
      %s82 = sphi 0, %s82
      %s84 = sphi 0, %s82
      %s85 = sphi 0, %s84
      %s99 = sphi 0, %s85
      %s103 = sphi 0, %s103
      %s105 = sphi 0, %s103
      %s106 = sphi 0, %s105
      %s120 = sphi 0, %s106
      %s124 = sphi 0, %s124
      %s126 = sphi 0, %s124
      %s127 = sphi 0, %s126
      %s141 = sphi 0, %s127
      %s145 = sphi 0, %s145
      %s147 = sphi 0, %s145
      %s148 = sphi 0, %s147
      %s162 = sphi 0, %s148
      %s166 = sphi 0, %s166
      %s168 = sphi 0, %s166
      %s169 = sphi 0, %s168
      %s183 = sphi 0, %s169
      %s187 = sphi 0, %s187
      %s189 = sphi 0, %s187
      %s190 = sphi 0, %s189
      %s204 = sphi 0, %s190
      %s208 = sphi 0, %s208
      %s210 = sphi 0, %s208
      %s211 = sphi 0, %s210
      %s225 = sphi 0, %s211
      %s231 = sphi 0, %s233
      %s234 = sphi 0, %s231
      %s235 = sphi 0, %s234
      %s251 = sphi 0, %s235
      %s257 = sphi 0, %s259
      %s260 = sphi 0, %s257
      %s261 = sphi 0, %s260
      %s277 = sphi 0, %s261
    $region4: #{tpu_custom_call.1} parent=1 // loop_header_branch
      %25 = sbr.rel (%p23) target = $region8
    $region5: #{tpu_custom_call.1} parent=1 // loop_body
      %s27 = ssub.s32 %s22, 1
      %s28 = ssub.s32 %s22, 2
      %s29 = sadd.s32 %s22, 1
      %s30 = ssub.s32 %s22, %s29
      %p31 = scmp.eq.s32.totalorder %s30, 0
      %s33 = sadd.s32 %s32, 1
      %s34 = scalar_select %p31, %s32, %s33
      %p37 = pneg %p31
      %p38 = scmp.eq.s32.totalorder %s22, 1
      %p39 = por %p37, %p38
      %p40 = scmp.ne.s32.totalorder %s32, %s35
      %p41 = scmp.eq.s32.totalorder %s22, 0
      %p42 = por %p40, %p41
      %p43 = scmp.ne.s32.totalorder %s32, %s35
      %p44 = scmp.eq.s32.totalorder %s27, 1
      %p45 = por %p43, %p44
      %p46 = scmp.ne.s32.totalorder %s35, %s36
      %p47 = scmp.eq.s32.totalorder %s27, 0
      %p48 = por %p46, %p47
      %p49 = scmp.ne.s32.totalorder %s35, %s36
      %p50 = scmp.eq.s32.totalorder %s28, 1
      %p51 = por %p49, %p50
      %p53 = scmp.ne.s32.totalorder %s36, %s52
      %p54 = scmp.eq.s32.totalorder %s28, 0
      %p55 = por %p53, %p54
      %s56 = ssub.s32 %s22, %s29
      %p57 = scmp.eq.s32.totalorder %s56, 0
      %s59 = sadd.s32 %s58, 1
      %s60 = scalar_select %p57, %s58, %s59
      %p63 = pneg %p57
      %p64 = scmp.eq.s32.totalorder %s22, 1
      %p65 = por %p63, %p64
      %p66 = scmp.ne.s32.totalorder %s58, %s61
      %p67 = scmp.eq.s32.totalorder %s22, 0
      %p68 = por %p66, %p67
      %p69 = scmp.ne.s32.totalorder %s58, %s61
      %p70 = scmp.eq.s32.totalorder %s27, 1
      %p71 = por %p69, %p70
      %p72 = scmp.ne.s32.totalorder %s61, %s62
      %p73 = scmp.eq.s32.totalorder %s27, 0
      %p74 = por %p72, %p73
      %p75 = scmp.ne.s32.totalorder %s61, %s62
      %p76 = scmp.eq.s32.totalorder %s28, 1
      %p77 = por %p75, %p76
      %p79 = scmp.ne.s32.totalorder %s62, %s78
      %p80 = scmp.eq.s32.totalorder %s28, 0
      %p81 = por %p79, %p80
      %s83 = sadd.s32 %s82, 1
      %p86 = scmp.eq.s32.totalorder %s22, 1
      %p87 = scmp.ne.s32.totalorder %s82, %s84
      %p88 = scmp.eq.s32.totalorder %s22, 0
      %p89 = por %p87, %p88
      %p90 = scmp.ne.s32.totalorder %s82, %s84
      %p91 = scmp.eq.s32.totalorder %s27, 1
      %p92 = por %p90, %p91
      %p93 = scmp.ne.s32.totalorder %s84, %s85
      %p94 = scmp.eq.s32.totalorder %s27, 0
      %p95 = por %p93, %p94
      %p96 = scmp.ne.s32.totalorder %s84, %s85
      %p97 = scmp.eq.s32.totalorder %s28, 1
      %p98 = por %p96, %p97
      %p100 = scmp.ne.s32.totalorder %s85, %s99
      %p101 = scmp.eq.s32.totalorder %s28, 0
      %p102 = por %p100, %p101
      %s104 = sadd.s32 %s103, 1
      %p107 = scmp.eq.s32.totalorder %s22, 1
      %p108 = scmp.ne.s32.totalorder %s103, %s105
      %p109 = scmp.eq.s32.totalorder %s22, 0
      %p110 = por %p108, %p109
      %p111 = scmp.ne.s32.totalorder %s103, %s105
      %p112 = scmp.eq.s32.totalorder %s27, 1
      %p113 = por %p111, %p112
      %p114 = scmp.ne.s32.totalorder %s105, %s106
      %p115 = scmp.eq.s32.totalorder %s27, 0
      %p116 = por %p114, %p115
      %p117 = scmp.ne.s32.totalorder %s105, %s106
      %p118 = scmp.eq.s32.totalorder %s28, 1
      %p119 = por %p117, %p118
      %p121 = scmp.ne.s32.totalorder %s106, %s120
      %p122 = scmp.eq.s32.totalorder %s28, 0
      %p123 = por %p121, %p122
      %s125 = sadd.s32 %s124, 1
      %p128 = scmp.eq.s32.totalorder %s22, 1
      %p129 = scmp.ne.s32.totalorder %s124, %s126
      %p130 = scmp.eq.s32.totalorder %s22, 0
      %p131 = por %p129, %p130
      %p132 = scmp.ne.s32.totalorder %s124, %s126
      %p133 = scmp.eq.s32.totalorder %s27, 1
      %p134 = por %p132, %p133
      %p135 = scmp.ne.s32.totalorder %s126, %s127
      %p136 = scmp.eq.s32.totalorder %s27, 0
      %p137 = por %p135, %p136
      %p138 = scmp.ne.s32.totalorder %s126, %s127
      %p139 = scmp.eq.s32.totalorder %s28, 1
      %p140 = por %p138, %p139
      %p142 = scmp.ne.s32.totalorder %s127, %s141
      %p143 = scmp.eq.s32.totalorder %s28, 0
      %p144 = por %p142, %p143
      %s146 = sadd.s32 %s145, 1
      %p149 = scmp.eq.s32.totalorder %s22, 1
      %p150 = scmp.ne.s32.totalorder %s145, %s147
      %p151 = scmp.eq.s32.totalorder %s22, 0
      %p152 = por %p150, %p151
      %p153 = scmp.ne.s32.totalorder %s145, %s147
      %p154 = scmp.eq.s32.totalorder %s27, 1
      %p155 = por %p153, %p154
      %p156 = scmp.ne.s32.totalorder %s147, %s148
      %p157 = scmp.eq.s32.totalorder %s27, 0
      %p158 = por %p156, %p157
      %p159 = scmp.ne.s32.totalorder %s147, %s148
      %p160 = scmp.eq.s32.totalorder %s28, 1
      %p161 = por %p159, %p160
      %p163 = scmp.ne.s32.totalorder %s148, %s162
      %p164 = scmp.eq.s32.totalorder %s28, 0
      %p165 = por %p163, %p164
      %s167 = sadd.s32 %s166, 1
      %p170 = scmp.eq.s32.totalorder %s22, 1
      %p171 = scmp.ne.s32.totalorder %s166, %s168
      %p172 = scmp.eq.s32.totalorder %s22, 0
      %p173 = por %p171, %p172
      %p174 = scmp.ne.s32.totalorder %s166, %s168
      %p175 = scmp.eq.s32.totalorder %s27, 1
      %p176 = por %p174, %p175
      %p177 = scmp.ne.s32.totalorder %s168, %s169
      %p178 = scmp.eq.s32.totalorder %s27, 0
      %p179 = por %p177, %p178
      %p180 = scmp.ne.s32.totalorder %s168, %s169
      %p181 = scmp.eq.s32.totalorder %s28, 1
      %p182 = por %p180, %p181
      %p184 = scmp.ne.s32.totalorder %s169, %s183
      %p185 = scmp.eq.s32.totalorder %s28, 0
      %p186 = por %p184, %p185
      %s188 = sadd.s32 %s187, 1
      %p191 = scmp.eq.s32.totalorder %s22, 1
      %p192 = scmp.ne.s32.totalorder %s187, %s189
      %p193 = scmp.eq.s32.totalorder %s22, 0
      %p194 = por %p192, %p193
      %p195 = scmp.ne.s32.totalorder %s187, %s189
      %p196 = scmp.eq.s32.totalorder %s27, 1
      %p197 = por %p195, %p196
      %p198 = scmp.ne.s32.totalorder %s189, %s190
      %p199 = scmp.eq.s32.totalorder %s27, 0
      %p200 = por %p198, %p199
      %p201 = scmp.ne.s32.totalorder %s189, %s190
      %p202 = scmp.eq.s32.totalorder %s28, 1
      %p203 = por %p201, %p202
      %p205 = scmp.ne.s32.totalorder %s190, %s204
      %p206 = scmp.eq.s32.totalorder %s28, 0
      %p207 = por %p205, %p206
      %s209 = sadd.s32 %s208, 1
      %p212 = scmp.eq.s32.totalorder %s22, 1
      %p213 = scmp.ne.s32.totalorder %s208, %s210
      %p214 = scmp.eq.s32.totalorder %s22, 0
      %p215 = por %p213, %p214
      %p216 = scmp.ne.s32.totalorder %s208, %s210
      %p217 = scmp.eq.s32.totalorder %s27, 1
      %p218 = por %p216, %p217
      %p219 = scmp.ne.s32.totalorder %s210, %s211
      %p220 = scmp.eq.s32.totalorder %s27, 0
      %p221 = por %p219, %p220
      %p222 = scmp.ne.s32.totalorder %s210, %s211
      %p223 = scmp.eq.s32.totalorder %s28, 1
      %p224 = por %p222, %p223
      %p226 = scmp.ne.s32.totalorder %s211, %s225
      %p227 = scmp.eq.s32.totalorder %s28, 0
      %p228 = por %p226, %p227
      %s229 = ssub.s32 %s22, %s29
      %p230 = scmp.eq.s32.totalorder %s229, 0
      %s232 = sadd.s32 %s231, 1
      %s233 = scalar_select %p230, %s231, %s232
      %p236 = pneg %p230
      %p237 = scmp.eq.s32.totalorder %s22, 1
      %p238 = por %p236, %p237
      %p239 = scmp.ne.s32.totalorder %s231, %s234
      %p240 = scmp.eq.s32.totalorder %s22, 0
      %p241 = por %p239, %p240
      %p242 = scmp.ne.s32.totalorder %s231, %s234
      %p243 = scmp.eq.s32.totalorder %s27, 1
      %p244 = por %p242, %p243
      %p245 = scmp.ne.s32.totalorder %s234, %s235
      %p246 = scmp.eq.s32.totalorder %s27, 0
      %p247 = por %p245, %p246
      %p248 = scmp.ne.s32.totalorder %s234, %s235
      %p249 = scmp.eq.s32.totalorder %s28, 1
      %p250 = por %p248, %p249
      %p252 = scmp.ne.s32.totalorder %s235, %s251
      %p253 = scmp.eq.s32.totalorder %s28, 0
      %p254 = por %p252, %p253
      %s255 = ssub.s32 %s22, %s29
      %p256 = scmp.eq.s32.totalorder %s255, 0
      %s258 = sadd.s32 %s257, 1
      %s259 = scalar_select %p256, %s257, %s258
      %p262 = pneg %p256
      %p263 = scmp.eq.s32.totalorder %s22, 1
      %p264 = por %p262, %p263
      %p265 = scmp.ne.s32.totalorder %s257, %s260
      %p266 = scmp.eq.s32.totalorder %s22, 0
      %p267 = por %p265, %p266
      %p268 = scmp.ne.s32.totalorder %s257, %s260
      %p269 = scmp.eq.s32.totalorder %s27, 1
      %p270 = por %p268, %p269
      %p271 = scmp.ne.s32.totalorder %s260, %s261
      %p272 = scmp.eq.s32.totalorder %s27, 0
      %p273 = por %p271, %p272
      %p274 = scmp.ne.s32.totalorder %s260, %s261
      %p275 = scmp.eq.s32.totalorder %s28, 1
      %p276 = por %p274, %p275
      %p278 = scmp.ne.s32.totalorder %s261, %s277
      %p279 = scmp.eq.s32.totalorder %s28, 0
      %p280 = por %p278, %p279
      %p281 = scmp.le.s32.totalorder 1, %s22
      %p282 = scmp.lt.s32.totalorder %s22, 3
      %p283 = pnand %p281, %p282
      %p284 = pneg %p283
      // Predicated region
      $region9: #{tpu_custom_call.1} parent=5 // pred_check
        _
      $region10: #{tpu_custom_call.1} parent=5 // pred_check_branch
        %286 = sbr.rel (%p283) target = $region12
      $region11: #{tpu_custom_call.1} parent=5 // pred_region
        %s287 = ssub.s32 %s22, 1
        // Predicated region
        $region13: #{tpu_custom_call.1} parent=11 // pred_check
          %p288 = pneg %p95
        $region14: #{tpu_custom_call.1} parent=11 // pred_check_branch
          %290 = sbr.rel (%p288) target = $region16
        $region15: #{tpu_custom_call.1} parent=11 // pred_region
          %s292 = ssub.s32 64, 64
          %293 = vsyncadd [#allocation5], %s292
          %s295 = sshll.u32 [#allocation4], 4
          %s296 = int_to_ptr.vmem [resolvable:$true] %s295
          %298 = dma.hbm_to_vmem [thread:$0]  %s2, 64, %s296, [#allocation5]
        $region16: #{tpu_custom_call.1} parent=11 // pred_fallthru
          _
        // Predicated region
        $region17: #{tpu_custom_call.1} parent=11 // pred_check
          %p299 = pneg %p116
        $region18: #{tpu_custom_call.1} parent=11 // pred_check_branch
          %301 = sbr.rel (%p299) target = $region20
        $region19: #{tpu_custom_call.1} parent=11 // pred_region
          _
        $region20: #{tpu_custom_call.1} parent=11 // pred_fallthru
          _
        // Predicated region
        $region21: #{tpu_custom_call.1} parent=11 // pred_check
          %p302 = pneg %p137
        $region22: #{tpu_custom_call.1} parent=11 // pred_check_branch
          %304 = sbr.rel (%p302) target = $region24
        $region23: #{tpu_custom_call.1} parent=11 // pred_region
          %s306 = ssub.s32 16, 16
          %307 = vsyncadd [#allocation8], %s306
          %s309 = sshll.u32 [#allocation7], 4
          %s310 = int_to_ptr.vmem [resolvable:$true] %s309
          %312 = dma.hbm_to_vmem [thread:$0]  %s4, 16, %s310, [#allocation8]
        $region24: #{tpu_custom_call.1} parent=11 // pred_fallthru
          _
        // Predicated region
        $region25: #{tpu_custom_call.1} parent=11 // pred_check
          %p313 = pneg %p158
        $region26: #{tpu_custom_call.1} parent=11 // pred_check_branch
          %315 = sbr.rel (%p313) target = $region28
        $region27: #{tpu_custom_call.1} parent=11 // pred_region
          _
        $region28: #{tpu_custom_call.1} parent=11 // pred_fallthru
          _
        // Predicated region
        $region29: #{tpu_custom_call.1} parent=11 // pred_check
          %p316 = pneg %p179
        $region30: #{tpu_custom_call.1} parent=11 // pred_check_branch
          %318 = sbr.rel (%p316) target = $region32
        $region31: #{tpu_custom_call.1} parent=11 // pred_region
          _
        $region32: #{tpu_custom_call.1} parent=11 // pred_fallthru
          _
        // Predicated region
        $region33: #{tpu_custom_call.1} parent=11 // pred_check
          %p319 = pneg %p200
        $region34: #{tpu_custom_call.1} parent=11 // pred_check_branch
          %321 = sbr.rel (%p319) target = $region36
        $region35: #{tpu_custom_call.1} parent=11 // pred_region
          _
        $region36: #{tpu_custom_call.1} parent=11 // pred_fallthru
          _
        // Predicated region
        $region37: #{tpu_custom_call.1} parent=11 // pred_check
          %p322 = pneg %p221
        $region38: #{tpu_custom_call.1} parent=11 // pred_check_branch
          %324 = sbr.rel (%p322) target = $region40
        $region39: #{tpu_custom_call.1} parent=11 // pred_region
          _
        $region40: #{tpu_custom_call.1} parent=11 // pred_fallthru
          _
      $region12: #{tpu_custom_call.1} parent=5 // pred_fallthru
        _
      %p325 = scmp.lt.s32.totalorder %s22, 2
      // Predicated region
      $region41: #{tpu_custom_call.1} parent=5 // pred_check
        %p326 = pneg %p325
      $region42: #{tpu_custom_call.1} parent=5 // pred_check_branch
        %328 = sbr.rel (%p326) target = $region44
      $region43: #{tpu_custom_call.1} parent=5 // pred_region
        // Predicated region
        $region45: #{tpu_custom_call.1} parent=43 // pred_check
          %p329 = pneg %p42
        $region46: #{tpu_custom_call.1} parent=43 // pred_check_branch
          %331 = sbr.rel (%p329) target = $region48
        $region47: #{tpu_custom_call.1} parent=43 // pred_region
          %p332 = scmp.lt.s32.totalorder %s22, 1
          %s333 = scalar_select %p332, %s22, 1
          %s334 = smul.addr %s333, 8
          %s335 = scalar_lea.vmem %s0, %s334
        $region48: #{tpu_custom_call.1} parent=43 // pred_fallthru
          _
        // Predicated region
        $region49: #{tpu_custom_call.1} parent=43 // pred_check
          %p336 = pneg %p68
        $region50: #{tpu_custom_call.1} parent=43 // pred_check_branch
          %338 = sbr.rel (%p336) target = $region52
        $region51: #{tpu_custom_call.1} parent=43 // pred_region
          %p339 = scmp.lt.s32.totalorder %s22, 1
          %s340 = scalar_select %p339, %s22, 1
          %s341 = smul.addr %s340, 8
          %s342 = scalar_lea.vmem %s1, %s341
        $region52: #{tpu_custom_call.1} parent=43 // pred_fallthru
          _
      $region44: #{tpu_custom_call.1} parent=5 // pred_fallthru
        _
      %p343 = scmp.le.s32.totalorder 1, %s22
      %p344 = scmp.lt.s32.totalorder %s22, 3
      %p345 = pnand %p343, %p344
      %p346 = pneg %p345
      // Predicated region
      $region53: #{tpu_custom_call.1} parent=5 // pred_check
        _
      $region54: #{tpu_custom_call.1} parent=5 // pred_check_branch
        %348 = sbr.rel (%p345) target = $region56
      $region55: #{tpu_custom_call.1} parent=5 // pred_region
        %s349 = ssub.s32 %s22, 1
        // Predicated region
        $region57: #{tpu_custom_call.1} parent=55 // pred_check
          %p350 = pneg %p95
        $region58: #{tpu_custom_call.1} parent=55 // pred_check_branch
          %352 = sbr.rel (%p350) target = $region60
        $region59: #{tpu_custom_call.1} parent=55 // pred_region
          %353 = dma.done [#allocation5], 64
        $region60: #{tpu_custom_call.1} parent=55 // pred_fallthru
          _
        // Predicated region
        $region61: #{tpu_custom_call.1} parent=55 // pred_check
          %p354 = pneg %p137
        $region62: #{tpu_custom_call.1} parent=55 // pred_check_branch
          %356 = sbr.rel (%p354) target = $region64
        $region63: #{tpu_custom_call.1} parent=55 // pred_region
          %357 = dma.done [#allocation8], 16
        $region64: #{tpu_custom_call.1} parent=55 // pred_fallthru
          _
        %p358 = scmp.lt.s32.totalorder %s27, 1
        %s359 = scalar_select %p358, %s27, 1
        %s360 = smul.addr %s359, 8
        %s361 = scalar_lea.vmem %s0, %s360
        %p362 = pneg %p48
        %p363 = pneg %p45
        %p364 = scmp.lt.s32.totalorder %s27, 1
        %s365 = scalar_select %p364, %s27, 1
        %s366 = smul.addr %s365, 8
        %s367 = scalar_lea.vmem %s1, %s366
        %p368 = pneg %p74
        %p369 = pneg %p71
        %p370 = pneg %p95
        %p371 = pneg %p92
        %p372 = pneg %p116
        %p373 = pneg %p113
        %p374 = pneg %p137
        %p375 = pneg %p134
        %p376 = pneg %p158
        %p377 = pneg %p155
        %p378 = pneg %p179
        %p379 = pneg %p176
        %p380 = pneg %p200
        %p381 = pneg %p197
        %p382 = pneg %p221
        %p383 = pneg %p218
        %p384 = pneg %p247
        %p385 = pneg %p244
        %s386 = sand.u32 %s234, 1
        %s387 = scalar_lea.sflag [#allocation6], %s386
        %s388 = sand.u32 %s234, 1
        %s389 = smul.addr %s388, 4
        %s390 = scalar_lea.vmem [#allocation9], %s389
        %p391 = pneg %p273
        %p392 = pneg %p270
        %p393 = scmp.lt.s32.totalorder %s27, 1
        %s394 = scalar_select %p393, %s27, 1
        %s395 = smul.addr %s394, 8
        %s396 = scalar_lea.vmem %s10, %s395
        %p397 = scmp.lt.s32.totalorder %s27, 1
        %s398 = scalar_select %p397, %s27, 1
        %s399 = smul.addr %s398, 8
        %s400 = scalar_lea.vmem %s0, %s399
        %p401 = scmp.lt.s32.totalorder %s27, 1
        %s402 = scalar_select %p401, %s27, 1
        %s403 = smul.addr %s402, 8
        %s404 = scalar_lea.vmem %s1, %s403
        %p405 = scmp.lt.s32.totalorder %s27, 1
        %s406 = scalar_select %p405, %s27, 1
        %s407 = smul.addr %s406, 8
        %s408 = scalar_lea.vmem %s10, %s407
        %v411 = vld [vmem:[%s400] sm:$0xff]
        %v412 = vpack.c.bf16 %v411, %v411
        %v413 = vld [vmem:[%s3] sm:$0xf]
        %v414 = vld [vmem:[%s3 + $0x4] sm:$0xf]
        %v415 = vld [vmem:[%s3 + $0x8] sm:$0xf]
        %v416 = vld [vmem:[%s3 + $0xc] sm:$0xf]
        %v417 = vld [vmem:[#allocation7] sm:$0x1]
        %v419 = vlaneseq
        %v420 = vshrl.u32 %v419, 7
        %v421 = vsub.s32 0, %v420
        %v422 = vrot.slane %v417, %v421
        %v428 = vunpack.c.l.b16 %v413
        %v429 = vunpack.c.l.b16 %v414
        %v430 = vunpack.c.l.b16 %v415
        %v431 = vunpack.c.l.b16 %v416
        %v432 = vpack.c.b16 %v429, %v428
        %v433 = vpack.c.b16 %v431, %v430
        %vm436 = vcmask 261120
        %v438 = vsel %vm436, %v412, 0
        %440 = vmatprep.subr.bf16.mxu0 0
        %441 = vmatpush1.bf16.msra.mxu0 %v432
        %442 = vmatprep.subr.bf16.mxu0 0
        %443 = vmatpush1.bf16.msra.mxu0 %v433
        %444 = vmatprep.subr.bf16.mxu0 0
        %445 = vmatpush1.bf16.msra.mxu0 0
        %446 = vmatprep.subr.bf16.mxu0 0
        %447 = vmatpush1.bf16.msra.mxu0 0
        %448 = vmatprep.subr.bf16.mxu0 0
        %449 = vmatpush1.bf16.msra.mxu0 0
        %450 = vmatprep.subr.bf16.mxu0 0
        %451 = vmatpush1.bf16.msra.mxu0 0
        %452 = vmatprep.subr.bf16.mxu0 0
        %453 = vmatpush1.bf16.msra.mxu0 0
        %454 = vmatprep.subr.bf16.mxu0 0
        %455 = vmatpush1.bf16.msra.mxu0 0
        %456 = vmatprep.subr.bf16.mxu0 0
        %457 = vmatpush1.bf16.msra.mxu0 0
        %458 = vmatprep.subr.bf16.mxu0 0
        %459 = vmatpush1.bf16.msra.mxu0 0
        %460 = vmatprep.subr.bf16.mxu0 0
        %461 = vmatpush1.bf16.msra.mxu0 0
        %462 = vmatprep.subr.bf16.mxu0 0
        %463 = vmatpush1.bf16.msra.mxu0 0
        %464 = vmatprep.subr.bf16.mxu0 0
        %465 = vmatpush1.bf16.msra.mxu0 0
        %466 = vmatprep.subr.bf16.mxu0 0
        %467 = vmatpush1.bf16.msra.mxu0 0
        %468 = vmatprep.subr.bf16.mxu0 0
        %469 = vmatpush1.bf16.msra.mxu0 0
        %470 = vmatprep.subr.bf16.mxu0 0
        %471 = vmatpush1.bf16.msra.mxu0 0
        %472 = vmatprep.mubr.bf16.mxu0 0
        %473 = vmatmul.mubr.bf16.gmra.mrb[0].mxu0 %v438
        %v474 = vpop.f32.mrb[0].mxu0
        %v475 = vadd.f32 %v422, %v474
        %v476 = vpop.f32.mrb[0].mxu0
        %v477 = vpop.f32.mrb[0].mxu0
        %v478 = vpop.f32.mrb[0].mxu0
        %479 = vdwg.mxu0
        %v480 = vld [vmem:[%s404] sm:$0xff]
        %482 = vset.pattern.permute.xlu0 0
        %483 = vperm.xlu0 %482, %v480
        %v484 = vpop.permute.xlu0 %483
        %v486 = vadd.f32 %v475, %v484
        %vm487 = vcmask 31744
        %v488 = vsel %vm487, %v486, -inf
        %489 = vmax.xlane.f32.xlu0 %v488
        %v490 = vpop.xlane.xlu0 %489
        %v491 = vsub.f32 %v486, %v490
        %v492 = vmul.f32 %v491, 1.442695
        %v493 = vpow.pop %v492
        %v494 = vsel %vm487, %v493, 0.0
        %495 = vadd.xlane.f32.xlu0 %v494
        %v496 = vpop.xlane.xlu0 %495
        %v497 = vrcp.pop %v496
        %v498 = vmul.f32 %v493, %v497
        %v499 = vlaneseq
        %v500 = vand.u32 %v499, 127
        %vm501 = vcmp.eq.f32.partialorder %v486, %v490
        %v502 = vsel %vm501, %v500, 4
        %v503 = vsel %vm487, %v502, 2147483647
        %v504 = vand.u32 %v503, 65535
        %v505 = vshra.s32 %v503, 16
        %v506 = vcvt.s32.f32 %v504
        %v507 = vcvt.s32.f32 %v505
        %508 = vmin.xlane.f32.xlu0 %v507
        %v509 = vpop.xlane.xlu0 %508
        %vm510 = vcmp.eq.f32.partialorder %v507, %v509
        %v511 = vsel %vm510, %v506, inf
        %512 = vmin.xlane.f32.xlu0 %v511
        %v513 = vpop.xlane.xlu0 %512
        %v514 = vcvt.f32.s32 %v513
        %v515 = vcvt.f32.s32 %v509
        %v516 = vshll.u32 %v515, 16
        %v517 = vadd.s32 %v516, %v514
        %vm518 = vcmask 7168
        %519 = vst.msk [vmem:[%s408] sm:$0xff] %vm518, %v517
        %v520 = vpack.c.bf16 %v498, %v498
        %521 = vxpose.xlu0.c.b16.start [1/8] %v520, 128
        %522 = vxpose.xlu0.c.b16.cont [2/8] 0, 128
        %523 = vxpose.xlu0.c.b16.cont [3/8] 0, 128
        %524 = vxpose.xlu0.c.b16.cont [4/8] 0, 128
        %525 = vxpose.xlu0.c.b16.cont [5/8] 0, 128
        %526 = vxpose.xlu0.c.b16.cont [6/8] 0, 128
        %527 = vxpose.xlu0.c.b16.cont [7/8] 0, 128
        %528 = vxpose.xlu0.c.b16.end [8/8] 0, 128
        %v529 = vpop.trf.xlu0
        %v530 = vpop.trf.xlu0
        %v531 = vpop.trf.xlu0
        %v532 = vpop.trf.xlu0
        %v533 = vpop.trf.xlu0
        %v534 = vpop.trf.xlu0
        %v535 = vpop.trf.xlu0
        %v536 = vpop.trf.xlu0
        %vm537 = vcmask 64512
        %v539 = vsel %vm537, %v529, 0
        %vm541 = vcmask 1043456
        %v542 = vsel %vm541, %v412, 0
        %544 = vmatprep.subr.bf16.mxu0 0
        %545 = vmatpush1.bf16.msra.mxu0 %v542
        %546 = vmatprep.subr.bf16.mxu0 0
        %547 = vmatpush1.bf16.msra.mxu0 0
        %548 = vmatprep.subr.bf16.mxu0 0
        %549 = vmatpush1.bf16.msra.mxu0 0
        %550 = vmatprep.subr.bf16.mxu0 0
        %551 = vmatpush1.bf16.msra.mxu0 0
        %552 = vmatprep.subr.bf16.mxu0 0
        %553 = vmatpush1.bf16.msra.mxu0 0
        %554 = vmatprep.subr.bf16.mxu0 0
        %555 = vmatpush1.bf16.msra.mxu0 0
        %556 = vmatprep.subr.bf16.mxu0 0
        %557 = vmatpush1.bf16.msra.mxu0 0
        %558 = vmatprep.subr.bf16.mxu0 0
        %559 = vmatpush1.bf16.msra.mxu0 0
        %560 = vmatprep.subr.bf16.mxu0 0
        %561 = vmatpush1.bf16.msra.mxu0 0
        %562 = vmatprep.subr.bf16.mxu0 0
        %563 = vmatpush1.bf16.msra.mxu0 0
        %564 = vmatprep.subr.bf16.mxu0 0
        %565 = vmatpush1.bf16.msra.mxu0 0
        %566 = vmatprep.subr.bf16.mxu0 0
        %567 = vmatpush1.bf16.msra.mxu0 0
        %568 = vmatprep.subr.bf16.mxu0 0
        %569 = vmatpush1.bf16.msra.mxu0 0
        %570 = vmatprep.subr.bf16.mxu0 0
        %571 = vmatpush1.bf16.msra.mxu0 0
        %572 = vmatprep.subr.bf16.mxu0 0
        %573 = vmatpush1.bf16.msra.mxu0 0
        %574 = vmatprep.subr.bf16.mxu0 0
        %575 = vmatpush1.bf16.msra.mxu0 0
        %576 = vmatprep.mubr.bf16.mxu0 0
        %577 = vmatmul.mubr.bf16.gmra.mrb[0].mxu0 %v539
        %v578 = vpop.f32.mrb[0].mxu0
        %v579 = vadd.f32 0.0, %v578
        %v580 = vpop.f32.mrb[0].mxu0
        %v581 = vpop.f32.mrb[0].mxu0
        %v582 = vpop.f32.mrb[0].mxu0
        %583 = vdwg.mxu0
        %vm584 = vcmask 257024
        %585 = vst.msk [vmem:[#allocation2] sm:$0xf] %vm584, %v579
        %v587 = vsel %vm541, 1065369472, 0
        %589 = vmatprep.subr.bf16.mxu0 0
        %590 = vmatpush1.bf16.msra.mxu0 %v587
        %591 = vmatprep.subr.bf16.mxu0 0
        %592 = vmatpush1.bf16.msra.mxu0 0
        %593 = vmatprep.subr.bf16.mxu0 0
        %594 = vmatpush1.bf16.msra.mxu0 0
        %595 = vmatprep.subr.bf16.mxu0 0
        %596 = vmatpush1.bf16.msra.mxu0 0
        %597 = vmatprep.subr.bf16.mxu0 0
        %598 = vmatpush1.bf16.msra.mxu0 0
        %599 = vmatprep.subr.bf16.mxu0 0
        %600 = vmatpush1.bf16.msra.mxu0 0
        %601 = vmatprep.subr.bf16.mxu0 0
        %602 = vmatpush1.bf16.msra.mxu0 0
        %603 = vmatprep.subr.bf16.mxu0 0
        %604 = vmatpush1.bf16.msra.mxu0 0
        %605 = vmatprep.subr.bf16.mxu0 0
        %606 = vmatpush1.bf16.msra.mxu0 0
        %607 = vmatprep.subr.bf16.mxu0 0
        %608 = vmatpush1.bf16.msra.mxu0 0
        %609 = vmatprep.subr.bf16.mxu0 0
        %610 = vmatpush1.bf16.msra.mxu0 0
        %611 = vmatprep.subr.bf16.mxu0 0
        %612 = vmatpush1.bf16.msra.mxu0 0
        %613 = vmatprep.subr.bf16.mxu0 0
        %614 = vmatpush1.bf16.msra.mxu0 0
        %615 = vmatprep.subr.bf16.mxu0 0
        %616 = vmatpush1.bf16.msra.mxu0 0
        %617 = vmatprep.subr.bf16.mxu0 0
        %618 = vmatpush1.bf16.msra.mxu0 0
        %619 = vmatprep.subr.bf16.mxu0 0
        %620 = vmatpush1.bf16.msra.mxu0 0
        %621 = vmatprep.mubr.bf16.mxu0 0
        %622 = vmatmul.mubr.bf16.gmra.mrb[0].mxu0 %v539
        %v623 = vpop.f32.mrb[0].mxu0
        %v624 = vadd.f32 0.0, %v623
        %v625 = vpop.f32.mrb[0].mxu0
        %v626 = vpop.f32.mrb[0].mxu0
        %v627 = vpop.f32.mrb[0].mxu0
        %628 = vdwg.mxu0
        %vm629 = vcmask 3072
        %630 = vst.msk [vmem:[#allocation3] sm:$0xf] %vm629, %v624
        %v631 = vld [vmem:[#allocation4] sm:$0xf]
        %v632 = vld [vmem:[#allocation2] sm:$0xf]
        %v633 = vpack.c.bf16 %v632, %v632
        %v634 = vld [vmem:[%s5] sm:$0xf]
        %v635 = vld [vmem:[%s5 + $0x4] sm:$0xf]
        %v636 = vld [vmem:[%s5 + $0x8] sm:$0xf]
        %v637 = vld [vmem:[%s5 + $0xc] sm:$0xf]
        %v642 = vunpack.c.l.b16 %v634
        %v643 = vunpack.c.l.b16 %v635
        %v644 = vunpack.c.l.b16 %v636
        %v645 = vunpack.c.l.b16 %v637
        %v646 = vpack.c.b16 %v643, %v642
        %v647 = vpack.c.b16 %v645, %v644
        %v651 = vsel %vm436, %v633, 0
        %653 = vmatprep.subr.bf16.mxu0 0
        %654 = vmatpush1.bf16.msra.mxu0 %v646
        %655 = vmatprep.subr.bf16.mxu0 0
        %656 = vmatpush1.bf16.msra.mxu0 %v647
        %657 = vmatprep.subr.bf16.mxu0 0
        %658 = vmatpush1.bf16.msra.mxu0 0
        %659 = vmatprep.subr.bf16.mxu0 0
        %660 = vmatpush1.bf16.msra.mxu0 0
        %661 = vmatprep.subr.bf16.mxu0 0
        %662 = vmatpush1.bf16.msra.mxu0 0
        %663 = vmatprep.subr.bf16.mxu0 0
        %664 = vmatpush1.bf16.msra.mxu0 0
        %665 = vmatprep.subr.bf16.mxu0 0
        %666 = vmatpush1.bf16.msra.mxu0 0
        %667 = vmatprep.subr.bf16.mxu0 0
        %668 = vmatpush1.bf16.msra.mxu0 0
        %669 = vmatprep.subr.bf16.mxu0 0
        %670 = vmatpush1.bf16.msra.mxu0 0
        %671 = vmatprep.subr.bf16.mxu0 0
        %672 = vmatpush1.bf16.msra.mxu0 0
        %673 = vmatprep.subr.bf16.mxu0 0
        %674 = vmatpush1.bf16.msra.mxu0 0
        %675 = vmatprep.subr.bf16.mxu0 0
        %676 = vmatpush1.bf16.msra.mxu0 0
        %677 = vmatprep.subr.bf16.mxu0 0
        %678 = vmatpush1.bf16.msra.mxu0 0
        %679 = vmatprep.subr.bf16.mxu0 0
        %680 = vmatpush1.bf16.msra.mxu0 0
        %681 = vmatprep.subr.bf16.mxu0 0
        %682 = vmatpush1.bf16.msra.mxu0 0
        %683 = vmatprep.subr.bf16.mxu0 0
        %684 = vmatpush1.bf16.msra.mxu0 0
        %685 = vmatprep.mubr.bf16.mxu0 0
        %686 = vmatmul.mubr.bf16.gmra.mrb[0].mxu0 %v651
        %v687 = vpop.f32.mrb[0].mxu0
        %v688 = vadd.f32 0.0, %v687
        %v689 = vpop.f32.mrb[0].mxu0
        %v690 = vpop.f32.mrb[0].mxu0
        %v691 = vpop.f32.mrb[0].mxu0
        %692 = vdwg.mxu0
        %v693 = vadd.f32 %v631, %v688
        %v694 = vld [vmem:[#allocation3] sm:$0xf]
        %v695 = vld [vmem:[%s6] sm:$0x1]
        %697 = vset.pattern.permute.xlu0 0
        %698 = vperm.xlu0 %697, %v694
        %v699 = vpop.permute.xlu0 %698
        %v702 = vlaneseq
        %v703 = vshrl.u32 %v702, 7
        %v704 = vsub.s32 0, %v703
        %v705 = vrot.slane %v695, %v704
        %v707 = vmul.f32 %v699, %v705
        %v708 = vadd.f32 %v693, %v707
        %v709 = vpack.c.bf16 %v708, %v708
        %v710 = vld [vmem:[%s7] sm:$0xf]
        %v711 = vld [vmem:[%s7 + $0x4] sm:$0xf]
        %v712 = vld [vmem:[%s7 + $0x8] sm:$0xf]
        %v713 = vld [vmem:[%s7 + $0xc] sm:$0xf]
        %v714 = vld [vmem:[%s8] sm:$0x1]
        %v716 = vlaneseq
        %v717 = vshrl.u32 %v716, 7
        %v718 = vsub.s32 0, %v717
        %v719 = vrot.slane %v714, %v718
        %v725 = vunpack.c.l.b16 %v710
        %v726 = vunpack.c.l.b16 %v711
        %v727 = vunpack.c.l.b16 %v712
        %v728 = vunpack.c.l.b16 %v713
        %v729 = vpack.c.b16 %v726, %v725
        %v730 = vpack.c.b16 %v728, %v727
        %v734 = vsel %vm436, %v709, 0
        %736 = vmatprep.subr.bf16.mxu0 0
        %737 = vmatpush1.bf16.msra.mxu0 %v729
        %738 = vmatprep.subr.bf16.mxu0 0
        %739 = vmatpush1.bf16.msra.mxu0 %v730
        %740 = vmatprep.subr.bf16.mxu0 0
        %741 = vmatpush1.bf16.msra.mxu0 0
        %742 = vmatprep.subr.bf16.mxu0 0
        %743 = vmatpush1.bf16.msra.mxu0 0
        %744 = vmatprep.subr.bf16.mxu0 0
        %745 = vmatpush1.bf16.msra.mxu0 0
        %746 = vmatprep.subr.bf16.mxu0 0
        %747 = vmatpush1.bf16.msra.mxu0 0
        %748 = vmatprep.subr.bf16.mxu0 0
        %749 = vmatpush1.bf16.msra.mxu0 0
        %750 = vmatprep.subr.bf16.mxu0 0
        %751 = vmatpush1.bf16.msra.mxu0 0
        %752 = vmatprep.subr.bf16.mxu0 0
        %753 = vmatpush1.bf16.msra.mxu0 0
        %754 = vmatprep.subr.bf16.mxu0 0
        %755 = vmatpush1.bf16.msra.mxu0 0
        %756 = vmatprep.subr.bf16.mxu0 0
        %757 = vmatpush1.bf16.msra.mxu0 0
        %758 = vmatprep.subr.bf16.mxu0 0
        %759 = vmatpush1.bf16.msra.mxu0 0
        %760 = vmatprep.subr.bf16.mxu0 0
        %761 = vmatpush1.bf16.msra.mxu0 0
        %762 = vmatprep.subr.bf16.mxu0 0
        %763 = vmatpush1.bf16.msra.mxu0 0
        %764 = vmatprep.subr.bf16.mxu0 0
        %765 = vmatpush1.bf16.msra.mxu0 0
        %766 = vmatprep.subr.bf16.mxu0 0
        %767 = vmatpush1.bf16.msra.mxu0 0
        %768 = vmatprep.mubr.bf16.mxu0 0
        %769 = vmatmul.mubr.bf16.gmra.mrb[0].mxu0 %v734
        %v770 = vpop.f32.mrb[0].mxu0
        %v771 = vadd.f32 %v719, %v770
        %v772 = vpop.f32.mrb[0].mxu0
        %v773 = vpop.f32.mrb[0].mxu0
        %v774 = vpop.f32.mrb[0].mxu0
        %775 = vdwg.mxu0
        %v776 = vmax.f32 %v771, 0.0
        %777 = vst.msk [vmem:[%s390] sm:$0xf] %vm584, %v776
        %s778 = sand.u32 %s234, 1
        %s779 = scalar_lea.sflag [#allocation6], %s778
        %s780 = sand.u32 %s234, 1
        %s781 = smul.addr %s780, 4
        %s782 = scalar_lea.vmem [#allocation9], %s781
        %p783 = scmp.lt.s32.totalorder %s27, 1
        %s784 = scalar_select %p783, %s27, 1
        %s785 = smul.addr %s784, 8
        %s786 = scalar_lea.vmem %s10, %s785
        // Predicated region
        $region65: #{tpu_custom_call.1} parent=55 // pred_check
          %p787 = pneg %p244
        $region66: #{tpu_custom_call.1} parent=55 // pred_check_branch
          %789 = sbr.rel (%p787) target = $region68
        $region67: #{tpu_custom_call.1} parent=55 // pred_region
          %s791 = ssub.s32 64, 64
          %792 = vsyncadd %s779, %s791
          %s793 = smul.addr %s27, 64
          %s794 = scalar_lea.hbm %s9, %s793
          %s796 = sshll.u32 %s782, 4
          %s797 = int_to_ptr.vmem [resolvable:$true] %s796
          %799 = dma.vmem_to_hbm [thread:$0]  %s797, 64, %s794, %s779
        $region68: #{tpu_custom_call.1} parent=55 // pred_fallthru
          _
        // Predicated region
        $region69: #{tpu_custom_call.1} parent=55 // pred_check
          %p800 = pneg %p270
        $region70: #{tpu_custom_call.1} parent=55 // pred_check_branch
          %802 = sbr.rel (%p800) target = $region72
        $region71: #{tpu_custom_call.1} parent=55 // pred_region
          _
        $region72: #{tpu_custom_call.1} parent=55 // pred_fallthru
          _
      $region56: #{tpu_custom_call.1} parent=5 // pred_fallthru
        _
      %p803 = scmp.le.s32.totalorder 2, %s22
      // Predicated region
      $region73: #{tpu_custom_call.1} parent=5 // pred_check
        %p804 = pneg %p803
      $region74: #{tpu_custom_call.1} parent=5 // pred_check_branch
        %806 = sbr.rel (%p804) target = $region76
      $region75: #{tpu_custom_call.1} parent=5 // pred_region
        %s807 = ssub.s32 %s22, 2
        // Predicated region
        $region77: #{tpu_custom_call.1} parent=75 // pred_check
          %p808 = pneg %p250
        $region78: #{tpu_custom_call.1} parent=75 // pred_check_branch
          %810 = sbr.rel (%p808) target = $region80
        $region79: #{tpu_custom_call.1} parent=75 // pred_region
          %s811 = sand.u32 %s235, 1
          %s812 = scalar_lea.sflag [#allocation6], %s811
          %s813 = sand.u32 %s235, 1
          %s814 = smul.addr %s813, 4
          %s815 = scalar_lea.vmem [#allocation9], %s814
          %816 = dma.done %s812, 64
        $region80: #{tpu_custom_call.1} parent=75 // pred_fallthru
          _
        // Predicated region
        $region81: #{tpu_custom_call.1} parent=75 // pred_check
          %p817 = pneg %p276
        $region82: #{tpu_custom_call.1} parent=75 // pred_check_branch
          %819 = sbr.rel (%p817) target = $region84
        $region83: #{tpu_custom_call.1} parent=75 // pred_region
          %p820 = scmp.lt.s32.totalorder %s28, 1
          %s821 = scalar_select %p820, %s28, 1
          %s822 = smul.addr %s821, 8
          %s823 = scalar_lea.vmem %s10, %s822
        $region84: #{tpu_custom_call.1} parent=75 // pred_fallthru
          _
      $region76: #{tpu_custom_call.1} parent=5 // pred_fallthru
        _
    $region6: #{tpu_custom_call.1} parent=1 // loop_footer
      %s26 = sadd.s32 1, %s22
    $region7: #{tpu_custom_call.1} parent=1 // loop_footer_branch
      %21 = sbr.rel target = $region3
    $region8: #{tpu_custom_call.1} parent=1 // loop_exit
      _
    %824 = vsyncpa [#allocation5], 1
    %s825 = scalar_lea.sflag [#allocation5], 1
    %826 = vsyncpa %s825, 1
    %827 = vsyncpa [#allocation8], 1
    %828 = vsyncpa [#allocation6], 1
    %s829 = scalar_lea.sflag [#allocation6], 1
    %830 = vsyncpa %s829, 1

</llo_original>
